<compile_context>
chip_gen: v7x
topology: tpu7x:2x2x1
jax: 0.10.0
libtpu: 0.0.40
codegen_flags: <defaults>
</compile_context>

<pallas_src>
import jax
import jax.numpy as jnp
from jax.experimental import pallas as pl
from jax.experimental.pallas import tpu as pltpu

OUT_FEATURES = 128 * 4  # fixed by the module (512), independent of `out_features` arg


def _round_up(x, m):
    return ((x + m - 1) // m) * m


def _choose_tm(b_pad, row_align, tm_cap):
    """Largest row-aligned tile that divides b_pad, fits tm_cap, and (when the
    batch is big enough) leaves >= 2 batch tiles so v7x megacore can shard the
    'parallel' axis across both TensorCores."""
    limit = max(row_align, tm_cap)
    if b_pad >= 2 * row_align:
        limit = min(limit, b_pad // 2)
    limit = min(limit, b_pad)
    best = row_align
    t = row_align
    while t <= limit:
        if b_pad % t == 0:
            best = t
        t += row_align
    return best


# ---------------------------------------------------------------------------
# Kernels
# ---------------------------------------------------------------------------
def _pre_linear_kernel_resident(x_ref, w_ref, b_ref, o_ref):
    # x_ref: (TM, K), w_ref: (K, 512) -- constant index_map, stays resident,
    # b_ref: (1, 512) f32, o_ref: (TM, 512).
    # Single pass: matmul on the MXU (f32 accumulation), bias add in f32,
    # cast once on the way out. No scratch, no extra output pass.
    acc = jnp.dot(x_ref[...], w_ref[...], preferred_element_type=jnp.float32)
    o_ref[...] = (acc + b_ref[...]).astype(o_ref.dtype)


def _pre_linear_kernel_ktiled(x_ref, w_ref, b_ref, o_ref, acc_ref):
    # Fallback for very large in_features: K is tiled (grid axis 1, innermost,
    # "arbitrary"), accumulate in an f32 VMEM scratch resident across K.
    k = pl.program_id(1)

    @pl.when(k == 0)
    def _():
        acc_ref[...] = jnp.zeros_like(acc_ref)

    acc_ref[...] += jnp.dot(
        x_ref[...], w_ref[...], preferred_element_type=jnp.float32)

    @pl.when(k == pl.num_programs(1) - 1)
    def _():
        o_ref[...] = (acc_ref[...] + b_ref[...]).astype(o_ref.dtype)


# ---------------------------------------------------------------------------
# Parameter prep (one-time, NOT per forward call)
# ---------------------------------------------------------------------------
def prepare_pre_linear_params(weight, bias, *, param_dtype=None):
    """weight: (512, in_features) in PyTorch nn.Linear layout; bias: (512,).

    Returns (w_t, b2d): w_t (in_features, 512), b2d (1, 512) f32.
    Pass param_dtype=jnp.bfloat16 to store weights in bf16 -- recommended on
    v5e/v6e/v7x alike (MXU is bf16-native everywhere; halves weight bytes).
    Accumulation and bias add stay f32 inside the kernel.
    """
    w_t = jnp.asarray(weight).T                       # (K, 512)
    if param_dtype is not None:
        w_t = w_t.astype(param_dtype)
    b2d = jnp.asarray(bias).reshape(1, OUT_FEATURES).astype(jnp.float32)
    return w_t, b2d


# ---------------------------------------------------------------------------
# Forward
# ---------------------------------------------------------------------------
def pre_linear_forward(x, w_t, b2d, *, tm=1024, out_dtype=None,
                       vmem_budget_bytes=40 << 20):
    """x: (B, in_features). w_t: (in_features, 512) pre-transposed.
    b2d: (1, 512) f32. Returns (B, 4, 128) in `out_dtype` (default: x.dtype).

    For the bandwidth-optimal path pass x/w_t in bf16 and (if the consumer
    accepts it) out_dtype=bf16; the epilogue is still f32-accurate.
    """
    B, K = x.shape
    assert w_t.shape == (K, OUT_FEATURES), w_t.shape
    if out_dtype is None:
        out_dtype = x.dtype

    x_item = jnp.dtype(x.dtype).itemsize
    w_item = jnp.dtype(w_t.dtype).itemsize
    o_item = jnp.dtype(out_dtype).itemsize

    # Row alignment follows vreg packing: 8 rows (f32), 16 (bf16/f16), 32 (1B).
    row_align = {1: 32, 2: 16}.get(x_item, 8)
    b_pad = _round_up(B, row_align)

    # Conservative double-buffer accounting for the resident weight + bias.
    w_bytes = 2 * K * OUT_FEATURES * w_item + 2 * OUT_FEATURES * 4

    use_resident = w_bytes <= (vmem_budget_bytes * 3) // 5

    if use_resident:
        # ---- Fast path: full-K weight resident, grid over batch tiles only.
        per_row = 2 * (K * x_item + OUT_FEATURES * o_item)  # x + y, double-buffered
        tm_cap = max(row_align, (vmem_budget_bytes - w_bytes) // per_row)
        tm_cap = min(tm_cap, max(tm, row_align))
        tm_cap = max(row_align, (tm_cap // row_align) * row_align)
        tm_eff = _choose_tm(b_pad, row_align, tm_cap)

        # Only the small batch remainder is ever padded (no K padding at all).
        x_p = x if b_pad == B else jnp.pad(x, ((0, b_pad - B), (0, 0)))

        grid = (b_pad // tm_eff,)
        footprint = w_bytes + tm_eff * per_row
        vmem_limit = min(48 << 20, max(32 << 20, int(footprint) + (8 << 20)))

        y = pl.pallas_call(
            _pre_linear_kernel_resident,
            out_shape=jax.ShapeDtypeStruct((b_pad, OUT_FEATURES), out_dtype),
            grid_spec=pltpu.PrefetchScalarGridSpec(
                num_scalar_prefetch=0,
                grid=grid,
                in_specs=[
                    pl.BlockSpec((tm_eff, K), lambda i: (i, 0)),
                    # Constant index_map: fetched once, stays in VMEM for all tiles.
                    pl.BlockSpec((K, OUT_FEATURES), lambda i: (0, 0)),
                    pl.BlockSpec((1, OUT_FEATURES), lambda i: (0, 0)),
                ],
                out_specs=pl.BlockSpec((tm_eff, OUT_FEATURES), lambda i: (i, 0)),
            ),
            compiler_params=pltpu.CompilerParams(
                dimension_semantics=("parallel",),   # batch axis -> megacore
                vmem_limit_bytes=vmem_limit,
            ),
        )(x_p, w_t, b2d)
    else:
        # ---- Fallback: huge in_features; tile K with an f32 accumulator.
        # TODO(synk): this rare path pads x/W along K per call; pad W once at
        # init if a production model ever hits it.
        tk_eff = 2048
        w_blk_bytes = 2 * tk_eff * OUT_FEATURES * w_item + 2 * OUT_FEATURES * 4
        per_row = (2 * (tk_eff * x_item + OUT_FEATURES * o_item)
                   + OUT_FEATURES * 4)               # + f32 accumulator scratch
        tm_cap = max(row_align, (vmem_budget_bytes - w_blk_bytes) // per_row)
        tm_cap = min(tm_cap, max(tm, row_align))
        tm_cap = max(row_align, (tm_cap // row_align) * row_align)
        tm_eff = _choose_tm(b_pad, row_align, tm_cap)

        k_pad = _round_up(K, tk_eff)
        x_p = x
        if b_pad != B or k_pad != K:
            x_p = jnp.pad(x, ((0, b_pad - B), (0, k_pad - K)))
        w_p = w_t if k_pad == K else jnp.pad(w_t, ((0, k_pad - K), (0, 0)))

        grid = (b_pad // tm_eff, k_pad // tk_eff)
        footprint = w_blk_bytes + tm_eff * per_row
        vmem_limit = min(48 << 20, max(32 << 20, int(footprint) + (8 << 20)))

        y = pl.pallas_call(
            _pre_linear_kernel_ktiled,
            out_shape=jax.ShapeDtypeStruct((b_pad, OUT_FEATURES), out_dtype),
            grid_spec=pltpu.PrefetchScalarGridSpec(
                num_scalar_prefetch=0,
                grid=grid,
                in_specs=[
                    pl.BlockSpec((tm_eff, tk_eff), lambda i, k: (i, k)),
                    pl.BlockSpec((tk_eff, OUT_FEATURES), lambda i, k: (k, 0)),
                    pl.BlockSpec((1, OUT_FEATURES), lambda i, k: (0, 0)),
                ],
                out_specs=pl.BlockSpec((tm_eff, OUT_FEATURES),
                                       lambda i, k: (i, 0)),
                scratch_shapes=[pltpu.VMEM((tm_eff, OUT_FEATURES), jnp.float32)],
            ),
            compiler_params=pltpu.CompilerParams(
                dimension_semantics=("parallel", "arbitrary"),
                vmem_limit_bytes=vmem_limit,
            ),
        )(x_p, w_p, b2d)

    if b_pad != B:
        y = y[:B]
    # view(-1, 4, 128): contiguous reshape, free.
    return y.reshape(-1, 4, 128)


if __name__ == "__main__":
    # Small shapes consistent with the module: batch=8, in_features=32.
    B, IN_FEATURES = 8, 32

    key = jax.random.PRNGKey(0)
    kx, kw, kb = jax.random.split(key, 3)

    # Deterministic parameter init (mimics PyTorch Linear uniform bound).
    bound = 1.0 / (IN_FEATURES ** 0.5)
    weight = jax.random.uniform(
        kw, (OUT_FEATURES, IN_FEATURES), jnp.float32, -bound, bound)
    bias = jax.random.uniform(
        kb, (OUT_FEATURES,), jnp.float32, -bound, bound)

    x = jax.random.normal(kx, (B, IN_FEATURES), jnp.float32)

    # One-time param prep (transpose + bias reshape happen here, not per call).
    w_t, b2d = prepare_pre_linear_params(weight, bias)

    out = pre_linear_forward(x, w_t, b2d)
    out = jax.block_until_ready(out)

    ref = (x @ weight.T + bias).reshape(-1, 4, 128)
    assert out.shape == (B, 4, 128), out.shape
    assert jnp.allclose(out, ref, atol=1e-5, rtol=1e-5)

    # bf16 storage path (recommended on v5e/v6e/v7x): bf16 x/W/y, f32 epilogue.
    w_bf16, b2d_bf16 = prepare_pre_linear_params(
        weight, bias, param_dtype=jnp.bfloat16)
    out_bf16 = pre_linear_forward(
        x.astype(jnp.bfloat16), w_bf16, b2d_bf16, out_dtype=jnp.bfloat16)
    out_bf16 = jax.block_until_ready(out_bf16)
    assert out_bf16.shape == (B, 4, 128), out_bf16.shape
    assert out_bf16.dtype == jnp.bfloat16
    assert jnp.allclose(out_bf16.astype(jnp.float32), ref, atol=5e-2, rtol=5e-2)

    print("KERNEL_OK")
</pallas_src>

<mosaic_0001>
module attributes {stable_mosaic.version = 11 : i64} {
  func.func @_pre_linear_kernel_resident(%arg0: i32, %arg1: memref<8x32xf32, #tpu.memory_space<vmem>>, %arg2: memref<32x512xf32, #tpu.memory_space<vmem>>, %arg3: memref<1x512xf32, #tpu.memory_space<vmem>>, %arg4: memref<8x512xf32, #tpu.memory_space<vmem>>) attributes {dimension_semantics = [#tpu.dimension_semantics<parallel>], iteration_bounds = array<i64: 1>, scalar_prefetch = 0 : i64, scratch_operands = 0 : i64, tpu.core_type = #tpu.core_type<tc>, window_params = [{transform_indices = @transform_0, window_bounds = array<i64: 8, 32>}, {pipeline_mode = #tpu.pipeline_mode<synchronous>, transform_indices = @transform_1, window_bounds = array<i64: 32, 512>}, {pipeline_mode = #tpu.pipeline_mode<synchronous>, transform_indices = @transform_2, window_bounds = array<i64: 1, 512>}, {transform_indices = @transform_3, window_bounds = array<i64: 8, 512>}]} {
    %c0 = arith.constant 0 : index
    %c0_0 = arith.constant 0 : index
    %0 = vector.load %arg1[%c0, %c0_0] : memref<8x32xf32, #tpu.memory_space<vmem>>, vector<8x32xf32>
    %c0_1 = arith.constant 0 : index
    %c0_2 = arith.constant 0 : index
    %1 = vector.load %arg2[%c0_1, %c0_2] : memref<32x512xf32, #tpu.memory_space<vmem>>, vector<32x512xf32>
    %cst = arith.constant dense<0.000000e+00> : vector<8x512xf32>
    %2 = tpu.matmul %0, %1, %cst {dimension_numbers = #tpu.dot_dimension_numbers<[1], [0], [0], [1], [0, 0, 1, 1], [], []>} : vector<8x32xf32>, vector<32x512xf32>, vector<8x512xf32> -> vector<8x512xf32>
    %c0_3 = arith.constant 0 : index
    %c0_4 = arith.constant 0 : index
    %3 = vector.load %arg3[%c0_3, %c0_4] : memref<1x512xf32, #tpu.memory_space<vmem>>, vector<1x512xf32>
    %4 = vector.broadcast %3 : vector<1x512xf32> to vector<8x512xf32>
    %5 = arith.addf %2, %4 : vector<8x512xf32>
    %c0_5 = arith.constant 0 : index
    %c0_6 = arith.constant 0 : index
    %6 = vector.load %arg4[%c0_5, %c0_6] : memref<8x512xf32, #tpu.memory_space<vmem>>, vector<8x512xf32>
    tpu.vector_store %arg4[%c0_5, %c0_6], %5 {strides = array<i32>} : memref<8x512xf32, #tpu.memory_space<vmem>>, vector<8x512xf32>,
    return
  }
  func.func @transform_0(%arg0: i32) -> (i32, i32) {
    %c0_i32 = arith.constant 0 : i32
    %c0_i32_0 = arith.constant 0 : i32
    return %arg0, %c0_i32 : i32, i32
  }
  func.func @transform_1(%arg0: i32) -> (i32, i32) {
    %c0_i32 = arith.constant 0 : i32
    %c0_i32_0 = arith.constant 0 : i32
    %c0_i32_1 = arith.constant 0 : i32
    return %c0_i32, %c0_i32_0 : i32, i32
  }
  func.func @transform_2(%arg0: i32) -> (i32, i32) {
    %c0_i32 = arith.constant 0 : i32
    %c0_i32_0 = arith.constant 0 : i32
    %c0_i32_1 = arith.constant 0 : i32
    return %c0_i32, %c0_i32_0 : i32, i32
  }
  func.func @transform_3(%arg0: i32) -> (i32, i32) {
    %c0_i32 = arith.constant 0 : i32
    %c0_i32_0 = arith.constant 0 : i32
    return %arg0, %c0_i32 : i32, i32
  }
}

</mosaic_0001>

<llo_original>
// kernel: tpu_custom_call.1
$region0: #{tpu_custom_call.1}
  #allocation0 [shape = 'u32[]', space=smem, size = 0x4, offset = 0x4, fixed_abs, tag = 'smem constant byte address 0x4 - core index']
  #allocation1 [shape = 'u32[144,128]{1,0:T(1,128)}', space=vmem, size = 0x12000, scoped, tag = 'internal scratch']
  %s0 = inlined_call_operand.hbm [shape: f32[8,32], index: 0, kind: input, shape index: {}]
  %s1 = inlined_call_operand.hbm [shape: f32[32,512], index: 1, kind: input, shape index: {}]
  %s2 = inlined_call_operand.vmem [shape: f32[1,512], index: 2, kind: input, shape index: {}]
  %s3 = inlined_call_operand.hbm [shape: f32[8,512], index: 3, kind: output, shape index: {}]
  %s4 = sld [smem:[#allocation0]]
  $region30: #{tpu_custom_call.1} parent=0
    _
  %s6 = ssub.s32 1, %s4
  %s7 = scalar_select 0, %s6, %s4
  $region1: #{tpu_custom_call.1} parent=0
    #allocation2 [shape = 'u8[4096]{0}', space=vmem, size = 0x1000, scoped, tag = 'input window, operand 0, single buffered']
    #allocation3 [shape = 's32[1]{0}', space=sflag, size = 0x4, scoped, tag = 'scoped memory for tpu_custom_call.1']
    #allocation4 [shape = 's32[1]{0}', space=sflag, size = 0x4, scoped, tag = 'scoped memory for tpu_custom_call.1']
    #allocation5 [shape = 'u8[65536]{0}', space=vmem, size = 0x10000, scoped, tag = 'input window, operand 1, single buffered']
    #allocation6 [shape = 's32[1]{0}', space=sflag, size = 0x4, scoped, tag = 'scoped memory for tpu_custom_call.1']
    #allocation7 [shape = 'u8[16384]{0}', space=vmem, size = 0x4000, scoped, tag = 'output window, operand 0, single buffered']
    %8 = vsyncpa [#allocation3], 0
    %9 = vsyncpa [#allocation6], 0
    %10 = vsyncpa [#allocation4], 0
    // Predicated region
    $region2: #{tpu_custom_call.1} parent=1 // pred_check
      _
    $region3: #{tpu_custom_call.1} parent=1 // pred_check_branch
      %12 = sbr.rel (0) target = $region5
    $region4: #{tpu_custom_call.1} parent=1 // pred_region
      %s14 = ssub.s32 128, 128
      %15 = vsyncadd [#allocation3], %s14
      %s17 = sshll.u32 [#allocation2], 4
      %s18 = int_to_ptr.vmem [resolvable:$true] %s17
      %20 = dma.hbm_to_vmem [thread:$0]  %s0, 128, %s18, [#allocation3]
    $region5: #{tpu_custom_call.1} parent=1 // pred_fallthru
      _
    // Predicated region
    $region6: #{tpu_custom_call.1} parent=1 // pred_check
      _
    $region7: #{tpu_custom_call.1} parent=1 // pred_check_branch
      %22 = sbr.rel (0) target = $region9
    $region8: #{tpu_custom_call.1} parent=1 // pred_region
      %s24 = ssub.s32 2048, 2048
      %25 = vsyncadd [#allocation6], %s24
      %s26 = sshll.u32 [#allocation5], 4
      %s27 = int_to_ptr.vmem [resolvable:$true] %s26
      %32 = dma.hbm_to_vmem [thread:$0]  %s1, 2048, %s27, [#allocation6], 512, 512, 32
    $region9: #{tpu_custom_call.1} parent=1 // pred_fallthru
      _
    // Predicated region
    $region10: #{tpu_custom_call.1} parent=1 // pred_check
      _
    $region11: #{tpu_custom_call.1} parent=1 // pred_check_branch
      %34 = sbr.rel (0) target = $region13
    $region12: #{tpu_custom_call.1} parent=1 // pred_region
      _
    $region13: #{tpu_custom_call.1} parent=1 // pred_fallthru
      _
    // Predicated region
    $region14: #{tpu_custom_call.1} parent=1 // pred_check
      _
    $region15: #{tpu_custom_call.1} parent=1 // pred_check_branch
      %36 = sbr.rel (0) target = $region17
    $region16: #{tpu_custom_call.1} parent=1 // pred_region
      %37 = dma.done [#allocation3], 128
    $region17: #{tpu_custom_call.1} parent=1 // pred_fallthru
      _
    // Predicated region
    $region18: #{tpu_custom_call.1} parent=1 // pred_check
      _
    $region19: #{tpu_custom_call.1} parent=1 // pred_check_branch
      %39 = sbr.rel (0) target = $region21
    $region20: #{tpu_custom_call.1} parent=1 // pred_region
      %40 = dma.done [#allocation6], 2048
    $region21: #{tpu_custom_call.1} parent=1 // pred_fallthru
      _
    %v41 = vld [vmem:[#allocation2] sm:$0xff]
    %v42 = vld [vmem:[#allocation5] sm:$0xff]
    %v43 = vld [vmem:[#allocation5 + $0x8] sm:$0xff]
    %v44 = vld [vmem:[#allocation5 + $0x10] sm:$0xff]
    %v45 = vld [vmem:[#allocation5 + $0x18] sm:$0xff]
    %v46 = vld [vmem:[#allocation5 + $0x20] sm:$0xff]
    %v47 = vld [vmem:[#allocation5 + $0x28] sm:$0xff]
    %v48 = vld [vmem:[#allocation5 + $0x30] sm:$0xff]
    %v49 = vld [vmem:[#allocation5 + $0x38] sm:$0xff]
    %v50 = vld [vmem:[#allocation5 + $0x40] sm:$0xff]
    %v51 = vld [vmem:[#allocation5 + $0x48] sm:$0xff]
    %v52 = vld [vmem:[#allocation5 + $0x50] sm:$0xff]
    %v53 = vld [vmem:[#allocation5 + $0x58] sm:$0xff]
    %v54 = vld [vmem:[#allocation5 + $0x60] sm:$0xff]
    %v55 = vld [vmem:[#allocation5 + $0x68] sm:$0xff]
    %v56 = vld [vmem:[#allocation5 + $0x70] sm:$0xff]
    %v57 = vld [vmem:[#allocation5 + $0x78] sm:$0xff]
    %v58 = vld [vmem:[%s2] sm:$0xf]
    %v60 = vlaneseq
    %v61 = vshrl.u32 %v60, 7
    %v62 = vsub.s32 0, %v61
    %v63 = vrot.slane %v58, %v62
    %v64 = vlaneseq
    %v65 = vshrl.u32 %v64, 7
    %v66 = vsub.s32 1, %v65
    %v67 = vrot.slane %v58, %v66
    %v68 = vlaneseq
    %v69 = vshrl.u32 %v68, 7
    %v70 = vsub.s32 2, %v69
    %v71 = vrot.slane %v58, %v70
    %v72 = vlaneseq
    %v73 = vshrl.u32 %v72, 7
    %v74 = vsub.s32 3, %v73
    %v75 = vrot.slane %v58, %v74
    %vm80 = vcmask 261120
    %v82 = vsel %vm80, %v41, 0
    %84 = vmatprep.subr.mxu0 %v43
    %85 = vmatpush1.msra.mxu0 %v42
    %86 = vmatprep.subr.mxu0 %v47
    %87 = vmatpush1.msra.mxu0 %v46
    %88 = vmatprep.subr.mxu0 %v51
    %89 = vmatpush1.msra.mxu0 %v50
    %90 = vmatprep.subr.mxu0 %v55
    %91 = vmatpush1.msra.mxu0 %v54
    %92 = vmatprep.subr.mxu0 0.0
    %93 = vmatpush1.msra.mxu0 0.0
    %94 = vmatprep.subr.mxu0 0.0
    %95 = vmatpush1.msra.mxu0 0.0
    %96 = vmatprep.subr.mxu0 0.0
    %97 = vmatpush1.msra.mxu0 0.0
    %98 = vmatprep.subr.mxu0 0.0
    %99 = vmatpush1.msra.mxu0 0.0
    %100 = vmatprep.subr.mxu0 0.0
    %101 = vmatpush1.msra.mxu0 0.0
    %102 = vmatprep.subr.mxu0 0.0
    %103 = vmatpush1.msra.mxu0 0.0
    %104 = vmatprep.subr.mxu0 0.0
    %105 = vmatpush1.msra.mxu0 0.0
    %106 = vmatprep.subr.mxu0 0.0
    %107 = vmatpush1.msra.mxu0 0.0
    %108 = vmatprep.subr.mxu0 0.0
    %109 = vmatpush1.msra.mxu0 0.0
    %110 = vmatprep.subr.mxu0 0.0
    %111 = vmatpush1.msra.mxu0 0.0
    %112 = vmatprep.subr.mxu0 0.0
    %113 = vmatpush1.msra.mxu0 0.0
    %114 = vmatprep.subr.mxu0 0.0
    %115 = vmatpush1.msra.mxu0 0.0
    %116 = vmatprep.subr.mxu0 0.0
    %117 = vmatpush1.msra.mxu0 0.0
    %118 = vmatprep.subr.mxu0 0.0
    %119 = vmatpush1.msra.mxu0 0.0
    %120 = vmatprep.subr.mxu0 0.0
    %121 = vmatpush1.msra.mxu0 0.0
    %122 = vmatprep.subr.mxu0 0.0
    %123 = vmatpush1.msra.mxu0 0.0
    %124 = vmatprep.subr.mxu0 0.0
    %125 = vmatpush1.msra.mxu0 0.0
    %126 = vmatprep.subr.mxu0 0.0
    %127 = vmatpush1.msra.mxu0 0.0
    %128 = vmatprep.subr.mxu0 0.0
    %129 = vmatpush1.msra.mxu0 0.0
    %130 = vmatprep.subr.mxu0 0.0
    %131 = vmatpush1.msra.mxu0 0.0
    %132 = vmatprep.subr.mxu0 0.0
    %133 = vmatpush1.msra.mxu0 0.0
    %134 = vmatprep.subr.mxu0 0.0
    %135 = vmatpush1.msra.mxu0 0.0
    %136 = vmatprep.subr.mxu0 0.0
    %137 = vmatpush1.msra.mxu0 0.0
    %138 = vmatprep.subr.mxu0 0.0
    %139 = vmatpush1.msra.mxu0 0.0
    %140 = vmatprep.subr.mxu0 0.0
    %141 = vmatpush1.msra.mxu0 0.0
    %142 = vmatprep.subr.mxu0 0.0
    %143 = vmatpush1.msra.mxu0 0.0
    %144 = vmatprep.subr.mxu0 0.0
    %145 = vmatpush1.msra.mxu0 0.0
    %146 = vmatprep.subr.mxu0 0.0
    %147 = vmatpush1.msra.mxu0 0.0
    %148 = vmatprep.mubr.f32.mxu0 0.0
    %149 = vmatmul.mubr.f32.gmra.mrb[0].mxu0 %v82
    %v150 = vpop.f32.mrb[0].mxu0
    %v151 = vadd.f32 %v63, %v150
    %v152 = vpop.f32.mrb[0].mxu0
    %v153 = vadd.f32 %v67, %v152
    %154 = vdwg.mxu0
    %155 = vmatprep.subr.mxu0 %v45
    %156 = vmatpush1.msra.mxu0 %v44
    %157 = vmatprep.subr.mxu0 %v49
    %158 = vmatpush1.msra.mxu0 %v48
    %159 = vmatprep.subr.mxu0 %v53
    %160 = vmatpush1.msra.mxu0 %v52
    %161 = vmatprep.subr.mxu0 %v57
    %162 = vmatpush1.msra.mxu0 %v56
    %163 = vmatprep.subr.mxu0 0.0
    %164 = vmatpush1.msra.mxu0 0.0
    %165 = vmatprep.subr.mxu0 0.0
    %166 = vmatpush1.msra.mxu0 0.0
    %167 = vmatprep.subr.mxu0 0.0
    %168 = vmatpush1.msra.mxu0 0.0
    %169 = vmatprep.subr.mxu0 0.0
    %170 = vmatpush1.msra.mxu0 0.0
    %171 = vmatprep.subr.mxu0 0.0
    %172 = vmatpush1.msra.mxu0 0.0
    %173 = vmatprep.subr.mxu0 0.0
    %174 = vmatpush1.msra.mxu0 0.0
    %175 = vmatprep.subr.mxu0 0.0
    %176 = vmatpush1.msra.mxu0 0.0
    %177 = vmatprep.subr.mxu0 0.0
    %178 = vmatpush1.msra.mxu0 0.0
    %179 = vmatprep.subr.mxu0 0.0
    %180 = vmatpush1.msra.mxu0 0.0
    %181 = vmatprep.subr.mxu0 0.0
    %182 = vmatpush1.msra.mxu0 0.0
    %183 = vmatprep.subr.mxu0 0.0
    %184 = vmatpush1.msra.mxu0 0.0
    %185 = vmatprep.subr.mxu0 0.0
    %186 = vmatpush1.msra.mxu0 0.0
    %187 = vmatprep.subr.mxu0 0.0
    %188 = vmatpush1.msra.mxu0 0.0
    %189 = vmatprep.subr.mxu0 0.0
    %190 = vmatpush1.msra.mxu0 0.0
    %191 = vmatprep.subr.mxu0 0.0
    %192 = vmatpush1.msra.mxu0 0.0
    %193 = vmatprep.subr.mxu0 0.0
    %194 = vmatpush1.msra.mxu0 0.0
    %195 = vmatprep.subr.mxu0 0.0
    %196 = vmatpush1.msra.mxu0 0.0
    %197 = vmatprep.subr.mxu0 0.0
    %198 = vmatpush1.msra.mxu0 0.0
    %199 = vmatprep.subr.mxu0 0.0
    %200 = vmatpush1.msra.mxu0 0.0
    %201 = vmatprep.subr.mxu0 0.0
    %202 = vmatpush1.msra.mxu0 0.0
    %203 = vmatprep.subr.mxu0 0.0
    %204 = vmatpush1.msra.mxu0 0.0
    %205 = vmatprep.subr.mxu0 0.0
    %206 = vmatpush1.msra.mxu0 0.0
    %207 = vmatprep.subr.mxu0 0.0
    %208 = vmatpush1.msra.mxu0 0.0
    %209 = vmatprep.subr.mxu0 0.0
    %210 = vmatpush1.msra.mxu0 0.0
    %211 = vmatprep.subr.mxu0 0.0
    %212 = vmatpush1.msra.mxu0 0.0
    %213 = vmatprep.subr.mxu0 0.0
    %214 = vmatpush1.msra.mxu0 0.0
    %215 = vmatprep.subr.mxu0 0.0
    %216 = vmatpush1.msra.mxu0 0.0
    %217 = vmatprep.subr.mxu0 0.0
    %218 = vmatpush1.msra.mxu0 0.0
    %219 = vmatprep.mubr.f32.mxu0 0.0
    %220 = vmatmul.mubr.f32.gmra.mrb[0].mxu0 %v82
    %v221 = vpop.f32.mrb[0].mxu0
    %v222 = vadd.f32 %v71, %v221
    %v223 = vpop.f32.mrb[0].mxu0
    %v224 = vadd.f32 %v75, %v223
    %225 = vdwg.mxu0
    %226 = vst [vmem:[#allocation7] sm:$0xff] %v151
    %227 = vst [vmem:[#allocation7 + $0x8] sm:$0xff] %v153
    %228 = vst [vmem:[#allocation7 + $0x10] sm:$0xff] %v222
    %229 = vst [vmem:[#allocation7 + $0x18] sm:$0xff] %v224
    // Predicated region
    $region22: #{tpu_custom_call.1} parent=1 // pred_check
      _
    $region23: #{tpu_custom_call.1} parent=1 // pred_check_branch
      %231 = sbr.rel (0) target = $region25
    $region24: #{tpu_custom_call.1} parent=1 // pred_region
      %s233 = ssub.s32 512, 512
      %234 = vsyncadd [#allocation4], %s233
      %s236 = sshll.u32 [#allocation7], 4
      %s237 = int_to_ptr.vmem [resolvable:$true] %s236
      %239 = dma.vmem_to_hbm [thread:$0]  %s237, 512, %s3, [#allocation4]
    $region25: #{tpu_custom_call.1} parent=1 // pred_fallthru
      _
    // Predicated region
    $region26: #{tpu_custom_call.1} parent=1 // pred_check
      _
    $region27: #{tpu_custom_call.1} parent=1 // pred_check_branch
      %241 = sbr.rel (0) target = $region29
    $region28: #{tpu_custom_call.1} parent=1 // pred_region
      %242 = dma.done [#allocation4], 512
    $region29: #{tpu_custom_call.1} parent=1 // pred_fallthru
      _
    %243 = vsyncpa [#allocation3], 1
    %244 = vsyncpa [#allocation6], 1
    %245 = vsyncpa [#allocation4], 1

</llo_original>
